<compile_context>
chip_gen: v7x
topology: tpu7x:2x2x1
jax: 0.10.0
libtpu: 0.0.40
codegen_flags: <defaults>
</compile_context>

<pallas_src>
import jax
import jax.numpy as jnp
from jax.experimental import pallas as pl
from jax.experimental.pallas import tpu as pltpu

INPUT_DIM = 20
HIDDEN_DIM = 64
OUTPUT_DIM = 10
BATCH = 2

# lane-dense padded widths (multiples of 128)
IN_PAD = 128
HID_PAD = 128
OUT_PAD = 128


def _round_up(x, m):
    return ((x + m - 1) // m) * m


def complex_block_kernel(alpha_ref, x_ref, w1_ref, b1_ref, w2_ref, b2_ref,
                         w3_ref, b3_ref, o_ref):
    # alpha is a (1, 1) f32 scalar held in SMEM
    alpha = alpha_ref[0, 0]

    x = x_ref[...]                                                  # (TILE_B, IN_PAD)

    # fc1 + ReLU
    h1 = jnp.dot(x, w1_ref[...], preferred_element_type=jnp.float32) + b1_ref[...]
    out1 = jnp.maximum(h1, 0.0)                                     # (TILE_B, HID_PAD)

    # fc2 + ReLU
    h2 = jnp.dot(out1, w2_ref[...], preferred_element_type=jnp.float32) + b2_ref[...]
    out2 = jnp.maximum(h2, 0.0)                                     # (TILE_B, HID_PAD)

    # residual-style mix: alpha*out1 + (1-alpha)*out2, one fewer multiply
    mix = out2 + alpha * (out1 - out2)

    # fc3 (lane-dense padded output slab)
    o_ref[...] = (jnp.dot(mix, w3_ref[...], preferred_element_type=jnp.float32)
                  + b3_ref[...]).astype(o_ref.dtype)                # (TILE_B, OUT_PAD)


def _pad2(a, rows, cols):
    r, c = a.shape
    return jnp.pad(a, ((0, rows - r), (0, cols - c)))


def complex_block(x, params):
    """x: (B, INPUT_DIM) f32. params: dict of weights (in,out layout)/biases/alpha."""
    B, in_dim = x.shape
    assert in_dim == INPUT_DIM

    # Batch tile: multiple of 8 sublanes; 128 once the batch is large enough.
    tile_b = 128 if B >= 128 else _round_up(B, 8)
    b_pad = _round_up(B, tile_b)
    grid = (b_pad // tile_b,)

    # --- layout plumbing: zero-pad everything to lane-dense shapes ---------
    x_p = jnp.zeros((b_pad, IN_PAD), jnp.float32).at[:B, :INPUT_DIM].set(x)
    w1 = _pad2(params["w1"], IN_PAD, HID_PAD)
    b1 = _pad2(params["b1"].reshape(1, -1), 1, HID_PAD)
    w2 = _pad2(params["w2"], HID_PAD, HID_PAD)
    b2 = _pad2(params["b2"].reshape(1, -1), 1, HID_PAD)
    w3 = _pad2(params["w3"], HID_PAD, OUT_PAD)
    b3 = _pad2(params["b3"].reshape(1, -1), 1, OUT_PAD)
    alpha = params["alpha"].reshape(1, 1).astype(jnp.float32)

    # advisory cost for XLA's scheduler (true, un-padded work)
    flops = 2 * B * (INPUT_DIM * HIDDEN_DIM
                     + HIDDEN_DIM * HIDDEN_DIM
                     + HIDDEN_DIM * OUTPUT_DIM)
    bytes_accessed = 4 * (B * INPUT_DIM + B * OUTPUT_DIM
                          + INPUT_DIM * HIDDEN_DIM + HIDDEN_DIM
                          + HIDDEN_DIM * HIDDEN_DIM + HIDDEN_DIM
                          + HIDDEN_DIM * OUTPUT_DIM + OUTPUT_DIM)
    cost = pl.CostEstimate(flops=flops, transcendentals=0,
                           bytes_accessed=bytes_accessed)

    out_p = pl.pallas_call(
        complex_block_kernel,
        out_shape=jax.ShapeDtypeStruct((b_pad, OUT_PAD), jnp.float32),
        grid=grid,
        in_specs=[
            pl.BlockSpec(memory_space=pltpu.SMEM),                      # alpha (1,1)
            pl.BlockSpec((tile_b, IN_PAD), lambda i: (i, 0)),           # x tile
            pl.BlockSpec((IN_PAD, HID_PAD), lambda i: (0, 0)),          # w1 (resident)
            pl.BlockSpec((1, HID_PAD), lambda i: (0, 0)),               # b1 (resident)
            pl.BlockSpec((HID_PAD, HID_PAD), lambda i: (0, 0)),         # w2 (resident)
            pl.BlockSpec((1, HID_PAD), lambda i: (0, 0)),               # b2 (resident)
            pl.BlockSpec((HID_PAD, OUT_PAD), lambda i: (0, 0)),         # w3 (resident)
            pl.BlockSpec((1, OUT_PAD), lambda i: (0, 0)),               # b3 (resident)
        ],
        out_specs=pl.BlockSpec((tile_b, OUT_PAD), lambda i: (i, 0)),
        compiler_params=pltpu.CompilerParams(
            dimension_semantics=("parallel",)),
        cost_estimate=cost,
    )(alpha, x_p, w1, b1, w2, b2, w3, b3)

    # slice back to the logical (B, OUTPUT_DIM) result
    return out_p[:B, :OUTPUT_DIM]


def init_params(key):
    """Deterministic init mimicking nn.Linear (uniform +/- 1/sqrt(fan_in))."""
    ks = jax.random.split(key, 7)

    def linear(kw, kb, fan_in, fan_out):
        bound = 1.0 / jnp.sqrt(jnp.float32(fan_in))
        # stored as (in, out) = transpose of PyTorch's (out, in)
        w = jax.random.uniform(kw, (fan_in, fan_out), jnp.float32, -bound, bound)
        b = jax.random.uniform(kb, (fan_out,), jnp.float32, -bound, bound)
        return w, b

    w1, b1 = linear(ks[0], ks[1], INPUT_DIM, HIDDEN_DIM)
    w2, b2 = linear(ks[2], ks[3], HIDDEN_DIM, HIDDEN_DIM)
    w3, b3 = linear(ks[4], ks[5], HIDDEN_DIM, OUTPUT_DIM)
    alpha = jax.random.uniform(ks[6], (1,), jnp.float32)  # torch.rand(1)
    return dict(w1=w1, b1=b1, w2=w2, b2=b2, w3=w3, b3=b3, alpha=alpha)


def complex_block_ref(x, p):
    out1 = jax.nn.relu(x @ p["w1"] + p["b1"])
    out2 = jax.nn.relu(out1 @ p["w2"] + p["b2"])
    a = p["alpha"][0]
    out = a * out1 + (1.0 - a) * out2
    return out @ p["w3"] + p["b3"]


if __name__ == "__main__":
    key = jax.random.PRNGKey(0)
    k_x, k_p = jax.random.split(key)
    # X = torch.rand(2, input_dim) equivalent
    x = jax.random.uniform(k_x, (BATCH, INPUT_DIM), jnp.float32)
    params = init_params(k_p)

    out = complex_block(x, params)
    out = jax.block_until_ready(out)

    ref = complex_block_ref(x, params)
    assert out.shape == (BATCH, OUTPUT_DIM)
    assert jnp.allclose(out, ref, atol=1e-5, rtol=1e-5), "mismatch vs JAX reference"
    print("KERNEL_OK")
</pallas_src>

<mosaic_0001>
module attributes {stable_mosaic.version = 11 : i64} {
  func.func @complex_block_kernel(%arg0: i32, %arg1: memref<1x1xf32, #tpu.memory_space<smem>>, %arg2: memref<8x128xf32, #tpu.memory_space<vmem>>, %arg3: memref<128x128xf32, #tpu.memory_space<vmem>>, %arg4: memref<1x128xf32, #tpu.memory_space<vmem>>, %arg5: memref<128x128xf32, #tpu.memory_space<vmem>>, %arg6: memref<1x128xf32, #tpu.memory_space<vmem>>, %arg7: memref<128x128xf32, #tpu.memory_space<vmem>>, %arg8: memref<1x128xf32, #tpu.memory_space<vmem>>, %arg9: memref<8x128xf32, #tpu.memory_space<vmem>>) attributes {dimension_semantics = [#tpu.dimension_semantics<parallel>], iteration_bounds = array<i64: 1>, scalar_prefetch = 0 : i64, scratch_operands = 0 : i64, tpu.core_type = #tpu.core_type<tc>, window_params = [{transform_indices = @transform_0, window_bounds = array<i64: 1, 1>}, {transform_indices = @transform_1, window_bounds = array<i64: 8, 128>}, {pipeline_mode = #tpu.pipeline_mode<synchronous>, transform_indices = @transform_2, window_bounds = array<i64: 128, 128>}, {pipeline_mode = #tpu.pipeline_mode<synchronous>, transform_indices = @transform_3, window_bounds = array<i64: 1, 128>}, {pipeline_mode = #tpu.pipeline_mode<synchronous>, transform_indices = @transform_4, window_bounds = array<i64: 128, 128>}, {pipeline_mode = #tpu.pipeline_mode<synchronous>, transform_indices = @transform_5, window_bounds = array<i64: 1, 128>}, {pipeline_mode = #tpu.pipeline_mode<synchronous>, transform_indices = @transform_6, window_bounds = array<i64: 128, 128>}, {pipeline_mode = #tpu.pipeline_mode<synchronous>, transform_indices = @transform_7, window_bounds = array<i64: 1, 128>}, {transform_indices = @transform_8, window_bounds = array<i64: 8, 128>}]} {
    %c0 = arith.constant 0 : index
    %c0_0 = arith.constant 0 : index
    %0 = memref.load %arg1[%c0, %c0_0] : memref<1x1xf32, #tpu.memory_space<smem>>
    %c0_1 = arith.constant 0 : index
    %c0_2 = arith.constant 0 : index
    %1 = vector.load %arg2[%c0_1, %c0_2] : memref<8x128xf32, #tpu.memory_space<vmem>>, vector<8x128xf32>
    %c0_3 = arith.constant 0 : index
    %c0_4 = arith.constant 0 : index
    %2 = vector.load %arg3[%c0_3, %c0_4] : memref<128x128xf32, #tpu.memory_space<vmem>>, vector<128x128xf32>
    %cst = arith.constant dense<0.000000e+00> : vector<8x128xf32>
    %3 = tpu.matmul %1, %2, %cst {dimension_numbers = #tpu.dot_dimension_numbers<[1], [0], [0], [1], [0, 0, 1, 1], [], []>} : vector<8x128xf32>, vector<128x128xf32>, vector<8x128xf32> -> vector<8x128xf32>
    %c0_5 = arith.constant 0 : index
    %c0_6 = arith.constant 0 : index
    %4 = vector.load %arg4[%c0_5, %c0_6] : memref<1x128xf32, #tpu.memory_space<vmem>>, vector<1x128xf32>
    %5 = vector.broadcast %4 : vector<1x128xf32> to vector<8x128xf32>
    %6 = arith.addf %3, %5 : vector<8x128xf32>
    %cst_7 = arith.constant 0.000000e+00 : f32
    %7 = vector.broadcast %cst_7 : f32 to vector<8x128xf32>
    %8 = arith.maximumf %6, %7 : vector<8x128xf32>
    %c0_8 = arith.constant 0 : index
    %c0_9 = arith.constant 0 : index
    %9 = vector.load %arg5[%c0_8, %c0_9] : memref<128x128xf32, #tpu.memory_space<vmem>>, vector<128x128xf32>
    %cst_10 = arith.constant dense<0.000000e+00> : vector<8x128xf32>
    %10 = tpu.matmul %8, %9, %cst_10 {dimension_numbers = #tpu.dot_dimension_numbers<[1], [0], [0], [1], [0, 0, 1, 1], [], []>} : vector<8x128xf32>, vector<128x128xf32>, vector<8x128xf32> -> vector<8x128xf32>
    %c0_11 = arith.constant 0 : index
    %c0_12 = arith.constant 0 : index
    %11 = vector.load %arg6[%c0_11, %c0_12] : memref<1x128xf32, #tpu.memory_space<vmem>>, vector<1x128xf32>
    %12 = vector.broadcast %11 : vector<1x128xf32> to vector<8x128xf32>
    %13 = arith.addf %10, %12 : vector<8x128xf32>
    %cst_13 = arith.constant 0.000000e+00 : f32
    %14 = vector.broadcast %cst_13 : f32 to vector<8x128xf32>
    %15 = arith.maximumf %13, %14 : vector<8x128xf32>
    %16 = arith.subf %8, %15 : vector<8x128xf32>
    %17 = vector.broadcast %0 : f32 to vector<8x128xf32>
    %18 = arith.mulf %17, %16 : vector<8x128xf32>
    %19 = arith.addf %15, %18 : vector<8x128xf32>
    %c0_14 = arith.constant 0 : index
    %c0_15 = arith.constant 0 : index
    %20 = vector.load %arg7[%c0_14, %c0_15] : memref<128x128xf32, #tpu.memory_space<vmem>>, vector<128x128xf32>
    %cst_16 = arith.constant dense<0.000000e+00> : vector<8x128xf32>
    %21 = tpu.matmul %19, %20, %cst_16 {dimension_numbers = #tpu.dot_dimension_numbers<[1], [0], [0], [1], [0, 0, 1, 1], [], []>} : vector<8x128xf32>, vector<128x128xf32>, vector<8x128xf32> -> vector<8x128xf32>
    %c0_17 = arith.constant 0 : index
    %c0_18 = arith.constant 0 : index
    %22 = vector.load %arg8[%c0_17, %c0_18] : memref<1x128xf32, #tpu.memory_space<vmem>>, vector<1x128xf32>
    %23 = vector.broadcast %22 : vector<1x128xf32> to vector<8x128xf32>
    %24 = arith.addf %21, %23 : vector<8x128xf32>
    %c0_19 = arith.constant 0 : index
    %c0_20 = arith.constant 0 : index
    %25 = vector.load %arg9[%c0_19, %c0_20] : memref<8x128xf32, #tpu.memory_space<vmem>>, vector<8x128xf32>
    tpu.vector_store %arg9[%c0_19, %c0_20], %24 {strides = array<i32>} : memref<8x128xf32, #tpu.memory_space<vmem>>, vector<8x128xf32>,
    return
  }
  func.func @transform_0(%arg0: i32) -> (i32, i32) {
    %c0_i32 = arith.constant 0 : i32
    %c0_i32_0 = arith.constant 0 : i32
    %c0_i32_1 = arith.constant 0 : i32
    return %c0_i32, %c0_i32_0 : i32, i32
  }
  func.func @transform_1(%arg0: i32) -> (i32, i32) {
    %c0_i32 = arith.constant 0 : i32
    %c0_i32_0 = arith.constant 0 : i32
    return %arg0, %c0_i32 : i32, i32
  }
  func.func @transform_2(%arg0: i32) -> (i32, i32) {
    %c0_i32 = arith.constant 0 : i32
    %c0_i32_0 = arith.constant 0 : i32
    %c0_i32_1 = arith.constant 0 : i32
    return %c0_i32, %c0_i32_0 : i32, i32
  }
  func.func @transform_3(%arg0: i32) -> (i32, i32) {
    %c0_i32 = arith.constant 0 : i32
    %c0_i32_0 = arith.constant 0 : i32
    %c0_i32_1 = arith.constant 0 : i32
    return %c0_i32, %c0_i32_0 : i32, i32
  }
  func.func @transform_4(%arg0: i32) -> (i32, i32) {
    %c0_i32 = arith.constant 0 : i32
    %c0_i32_0 = arith.constant 0 : i32
    %c0_i32_1 = arith.constant 0 : i32
    return %c0_i32, %c0_i32_0 : i32, i32
  }
  func.func @transform_5(%arg0: i32) -> (i32, i32) {
    %c0_i32 = arith.constant 0 : i32
    %c0_i32_0 = arith.constant 0 : i32
    %c0_i32_1 = arith.constant 0 : i32
    return %c0_i32, %c0_i32_0 : i32, i32
  }
  func.func @transform_6(%arg0: i32) -> (i32, i32) {
    %c0_i32 = arith.constant 0 : i32
    %c0_i32_0 = arith.constant 0 : i32
    %c0_i32_1 = arith.constant 0 : i32
    return %c0_i32, %c0_i32_0 : i32, i32
  }
  func.func @transform_7(%arg0: i32) -> (i32, i32) {
    %c0_i32 = arith.constant 0 : i32
    %c0_i32_0 = arith.constant 0 : i32
    %c0_i32_1 = arith.constant 0 : i32
    return %c0_i32, %c0_i32_0 : i32, i32
  }
  func.func @transform_8(%arg0: i32) -> (i32, i32) {
    %c0_i32 = arith.constant 0 : i32
    %c0_i32_0 = arith.constant 0 : i32
    return %arg0, %c0_i32 : i32, i32
  }
}

</mosaic_0001>

<llo_original>
// kernel: tpu_custom_call.1
$region0: #{tpu_custom_call.1}
  #allocation0 [shape = 'u32[]', space=smem, size = 0x4, offset = 0x4, fixed_abs, tag = 'smem constant byte address 0x4 - core index']
  #allocation1 [shape = 'u32[144,128]{1,0:T(1,128)}', space=vmem, size = 0x12000, scoped, tag = 'internal scratch']
  #allocation2 [shape = 'f32[1,1]{1,0:T(1,128)S(6)}', space=smem, size = 0x200, scoped, tag = 'scoped memory for tpu_custom_call.1']
  %s0 = inlined_call_operand.<no memory space> [shape: f32[1,1], index: 0, kind: input, shape index: {}]
  %s1 = inlined_call_operand.hbm [shape: f32[8,128], index: 1, kind: input, shape index: {}]
  %s2 = inlined_call_operand.hbm [shape: f32[128,128], index: 2, kind: input, shape index: {}]
  %s3 = inlined_call_operand.vmem [shape: f32[1,128], index: 3, kind: input, shape index: {}]
  %s4 = inlined_call_operand.hbm [shape: f32[128,128], index: 4, kind: input, shape index: {}]
  %s5 = inlined_call_operand.vmem [shape: f32[1,128], index: 5, kind: input, shape index: {}]
  %s6 = inlined_call_operand.hbm [shape: f32[128,128], index: 6, kind: input, shape index: {}]
  %s7 = inlined_call_operand.vmem [shape: f32[1,128], index: 7, kind: input, shape index: {}]
  %s8 = inlined_call_operand.hbm [shape: f32[8,128], index: 8, kind: output, shape index: {}]
  %s9 = sld [smem:[#allocation0]]
  $region58: #{tpu_custom_call.1} parent=0
    _
  %s11 = ssub.s32 1, %s9
  %s12 = scalar_select 0, %s11, %s9
  %13 = sst [smem:[#allocation2]] %s0
  $region1: #{tpu_custom_call.1} parent=0
    #allocation3 [shape = 'u8[4096]{0}', space=vmem, size = 0x1000, scoped, tag = 'input window, operand 1, single buffered']
    #allocation4 [shape = 's32[1]{0}', space=sflag, size = 0x4, scoped, tag = 'scoped memory for tpu_custom_call.1']
    #allocation5 [shape = 's32[1]{0}', space=sflag, size = 0x4, scoped, tag = 'scoped memory for tpu_custom_call.1']
    #allocation6 [shape = 'u8[65536]{0}', space=vmem, size = 0x10000, scoped, tag = 'input window, operand 2, single buffered']
    #allocation7 [shape = 's32[1]{0}', space=sflag, size = 0x4, scoped, tag = 'scoped memory for tpu_custom_call.1']
    #allocation8 [shape = 'u8[65536]{0}', space=vmem, size = 0x10000, scoped, tag = 'input window, operand 4, single buffered']
    #allocation9 [shape = 'u8[65536]{0}', space=vmem, size = 0x10000, scoped, tag = 'input window, operand 6, single buffered']
    #allocation10 [shape = 's32[1]{0}', space=sflag, size = 0x4, scoped, tag = 'scoped memory for tpu_custom_call.1']
    #allocation11 [shape = 'u8[4096]{0}', space=vmem, size = 0x1000, scoped, tag = 'output window, operand 0, single buffered']
    %14 = vsyncpa [#allocation4], 0
    %15 = vsyncpa [#allocation7], 0
    %16 = vsyncpa [#allocation10], 0
    %17 = vsyncpa [#allocation5], 0
    // Predicated region
    $region2: #{tpu_custom_call.1} parent=1 // pred_check
      _
    $region3: #{tpu_custom_call.1} parent=1 // pred_check_branch
      %19 = sbr.rel (0) target = $region5
    $region4: #{tpu_custom_call.1} parent=1 // pred_region
      _
    $region5: #{tpu_custom_call.1} parent=1 // pred_fallthru
      _
    // Predicated region
    $region6: #{tpu_custom_call.1} parent=1 // pred_check
      _
    $region7: #{tpu_custom_call.1} parent=1 // pred_check_branch
      %21 = sbr.rel (0) target = $region9
    $region8: #{tpu_custom_call.1} parent=1 // pred_region
      %s23 = ssub.s32 128, 128
      %24 = vsyncadd [#allocation4], %s23
      %s26 = sshll.u32 [#allocation3], 4
      %s27 = int_to_ptr.vmem [resolvable:$true] %s26
      %29 = dma.hbm_to_vmem [thread:$0]  %s1, 128, %s27, [#allocation4]
    $region9: #{tpu_custom_call.1} parent=1 // pred_fallthru
      _
    // Predicated region
    $region10: #{tpu_custom_call.1} parent=1 // pred_check
      _
    $region11: #{tpu_custom_call.1} parent=1 // pred_check_branch
      %31 = sbr.rel (0) target = $region13
    $region12: #{tpu_custom_call.1} parent=1 // pred_region
      %s33 = ssub.s32 2048, 2048
      %34 = vsyncadd [#allocation7], %s33
      %s35 = sshll.u32 [#allocation6], 4
      %s36 = int_to_ptr.vmem [resolvable:$true] %s35
      %41 = dma.hbm_to_vmem [thread:$0]  %s2, 2048, %s36, [#allocation7], 128, 128, 8
    $region13: #{tpu_custom_call.1} parent=1 // pred_fallthru
      _
    // Predicated region
    $region14: #{tpu_custom_call.1} parent=1 // pred_check
      _
    $region15: #{tpu_custom_call.1} parent=1 // pred_check_branch
      %43 = sbr.rel (0) target = $region17
    $region16: #{tpu_custom_call.1} parent=1 // pred_region
      _
    $region17: #{tpu_custom_call.1} parent=1 // pred_fallthru
      _
    // Predicated region
    $region18: #{tpu_custom_call.1} parent=1 // pred_check
      _
    $region19: #{tpu_custom_call.1} parent=1 // pred_check_branch
      %45 = sbr.rel (0) target = $region21
    $region20: #{tpu_custom_call.1} parent=1 // pred_region
      %s47 = ssub.s32 2048, 2048
      %48 = vsyncadd [#allocation7], %s47
      %s49 = sshll.u32 [#allocation8], 4
      %s50 = int_to_ptr.vmem [resolvable:$true] %s49
      %55 = dma.hbm_to_vmem [thread:$0]  %s4, 2048, %s50, [#allocation7], 128, 128, 8
    $region21: #{tpu_custom_call.1} parent=1 // pred_fallthru
      _
    // Predicated region
    $region22: #{tpu_custom_call.1} parent=1 // pred_check
      _
    $region23: #{tpu_custom_call.1} parent=1 // pred_check_branch
      %57 = sbr.rel (0) target = $region25
    $region24: #{tpu_custom_call.1} parent=1 // pred_region
      _
    $region25: #{tpu_custom_call.1} parent=1 // pred_fallthru
      _
    // Predicated region
    $region26: #{tpu_custom_call.1} parent=1 // pred_check
      _
    $region27: #{tpu_custom_call.1} parent=1 // pred_check_branch
      %59 = sbr.rel (0) target = $region29
    $region28: #{tpu_custom_call.1} parent=1 // pred_region
      %s61 = ssub.s32 2048, 2048
      %62 = vsyncadd [#allocation10], %s61
      %s63 = sshll.u32 [#allocation9], 4
      %s64 = int_to_ptr.vmem [resolvable:$true] %s63
      %69 = dma.hbm_to_vmem [thread:$0]  %s6, 2048, %s64, [#allocation10], 128, 128, 8
    $region29: #{tpu_custom_call.1} parent=1 // pred_fallthru
      _
    // Predicated region
    $region30: #{tpu_custom_call.1} parent=1 // pred_check
      _
    $region31: #{tpu_custom_call.1} parent=1 // pred_check_branch
      %71 = sbr.rel (0) target = $region33
    $region32: #{tpu_custom_call.1} parent=1 // pred_region
      _
    $region33: #{tpu_custom_call.1} parent=1 // pred_fallthru
      _
    // Predicated region
    $region34: #{tpu_custom_call.1} parent=1 // pred_check
      _
    $region35: #{tpu_custom_call.1} parent=1 // pred_check_branch
      %73 = sbr.rel (0) target = $region37
    $region36: #{tpu_custom_call.1} parent=1 // pred_region
      %74 = dma.done [#allocation4], 128
    $region37: #{tpu_custom_call.1} parent=1 // pred_fallthru
      _
    // Predicated region
    $region38: #{tpu_custom_call.1} parent=1 // pred_check
      _
    $region39: #{tpu_custom_call.1} parent=1 // pred_check_branch
      %76 = sbr.rel (0) target = $region41
    $region40: #{tpu_custom_call.1} parent=1 // pred_region
      %77 = dma.done [#allocation7], 2048
    $region41: #{tpu_custom_call.1} parent=1 // pred_fallthru
      _
    // Predicated region
    $region42: #{tpu_custom_call.1} parent=1 // pred_check
      _
    $region43: #{tpu_custom_call.1} parent=1 // pred_check_branch
      %79 = sbr.rel (0) target = $region45
    $region44: #{tpu_custom_call.1} parent=1 // pred_region
      %80 = dma.done [#allocation7], 2048
    $region45: #{tpu_custom_call.1} parent=1 // pred_fallthru
      _
    // Predicated region
    $region46: #{tpu_custom_call.1} parent=1 // pred_check
      _
    $region47: #{tpu_custom_call.1} parent=1 // pred_check_branch
      %82 = sbr.rel (0) target = $region49
    $region48: #{tpu_custom_call.1} parent=1 // pred_region
      %83 = dma.done [#allocation10], 2048
    $region49: #{tpu_custom_call.1} parent=1 // pred_fallthru
      _
    %s84 = sld [smem:[#allocation2]]
    %v85 = vld [vmem:[#allocation3] sm:$0xff]
    %v86 = vld [vmem:[#allocation6] sm:$0xff]
    %v87 = vld [vmem:[#allocation6 + $0x8] sm:$0xff]
    %v88 = vld [vmem:[#allocation6 + $0x10] sm:$0xff]
    %v89 = vld [vmem:[#allocation6 + $0x18] sm:$0xff]
    %v90 = vld [vmem:[#allocation6 + $0x20] sm:$0xff]
    %v91 = vld [vmem:[#allocation6 + $0x28] sm:$0xff]
    %v92 = vld [vmem:[#allocation6 + $0x30] sm:$0xff]
    %v93 = vld [vmem:[#allocation6 + $0x38] sm:$0xff]
    %v94 = vld [vmem:[#allocation6 + $0x40] sm:$0xff]
    %v95 = vld [vmem:[#allocation6 + $0x48] sm:$0xff]
    %v96 = vld [vmem:[#allocation6 + $0x50] sm:$0xff]
    %v97 = vld [vmem:[#allocation6 + $0x58] sm:$0xff]
    %v98 = vld [vmem:[#allocation6 + $0x60] sm:$0xff]
    %v99 = vld [vmem:[#allocation6 + $0x68] sm:$0xff]
    %v100 = vld [vmem:[#allocation6 + $0x70] sm:$0xff]
    %v101 = vld [vmem:[#allocation6 + $0x78] sm:$0xff]
    %v102 = vld [vmem:[%s3] sm:$0x1]
    %v104 = vlaneseq
    %v105 = vshrl.u32 %v104, 7
    %v106 = vsub.s32 0, %v105
    %v107 = vrot.slane %v102, %v106
    %109 = vmatprep.subr.mxu0 0.0
    %110 = vmatpush1.msra.mxu0 %v86
    %111 = vmatprep.subr.mxu0 0.0
    %112 = vmatpush1.msra.mxu0 %v87
    %113 = vmatprep.subr.mxu0 0.0
    %114 = vmatpush1.msra.mxu0 %v88
    %115 = vmatprep.subr.mxu0 0.0
    %116 = vmatpush1.msra.mxu0 %v89
    %117 = vmatprep.subr.mxu0 0.0
    %118 = vmatpush1.msra.mxu0 %v90
    %119 = vmatprep.subr.mxu0 0.0
    %120 = vmatpush1.msra.mxu0 %v91
    %121 = vmatprep.subr.mxu0 0.0
    %122 = vmatpush1.msra.mxu0 %v92
    %123 = vmatprep.subr.mxu0 0.0
    %124 = vmatpush1.msra.mxu0 %v93
    %125 = vmatprep.subr.mxu0 0.0
    %126 = vmatpush1.msra.mxu0 %v94
    %127 = vmatprep.subr.mxu0 0.0
    %128 = vmatpush1.msra.mxu0 %v95
    %129 = vmatprep.subr.mxu0 0.0
    %130 = vmatpush1.msra.mxu0 %v96
    %131 = vmatprep.subr.mxu0 0.0
    %132 = vmatpush1.msra.mxu0 %v97
    %133 = vmatprep.subr.mxu0 0.0
    %134 = vmatpush1.msra.mxu0 %v98
    %135 = vmatprep.subr.mxu0 0.0
    %136 = vmatpush1.msra.mxu0 %v99
    %137 = vmatprep.subr.mxu0 0.0
    %138 = vmatpush1.msra.mxu0 %v100
    %139 = vmatprep.subr.mxu0 0.0
    %140 = vmatpush1.msra.mxu0 %v101
    %141 = vmatprep.subr.mxu0 0.0
    %142 = vmatpush1.msra.mxu0 0.0
    %143 = vmatprep.subr.mxu0 0.0
    %144 = vmatpush1.msra.mxu0 0.0
    %145 = vmatprep.subr.mxu0 0.0
    %146 = vmatpush1.msra.mxu0 0.0
    %147 = vmatprep.subr.mxu0 0.0
    %148 = vmatpush1.msra.mxu0 0.0
    %149 = vmatprep.subr.mxu0 0.0
    %150 = vmatpush1.msra.mxu0 0.0
    %151 = vmatprep.subr.mxu0 0.0
    %152 = vmatpush1.msra.mxu0 0.0
    %153 = vmatprep.subr.mxu0 0.0
    %154 = vmatpush1.msra.mxu0 0.0
    %155 = vmatprep.subr.mxu0 0.0
    %156 = vmatpush1.msra.mxu0 0.0
    %157 = vmatprep.subr.mxu0 0.0
    %158 = vmatpush1.msra.mxu0 0.0
    %159 = vmatprep.subr.mxu0 0.0
    %160 = vmatpush1.msra.mxu0 0.0
    %161 = vmatprep.subr.mxu0 0.0
    %162 = vmatpush1.msra.mxu0 0.0
    %163 = vmatprep.subr.mxu0 0.0
    %164 = vmatpush1.msra.mxu0 0.0
    %165 = vmatprep.subr.mxu0 0.0
    %166 = vmatpush1.msra.mxu0 0.0
    %167 = vmatprep.subr.mxu0 0.0
    %168 = vmatpush1.msra.mxu0 0.0
    %169 = vmatprep.subr.mxu0 0.0
    %170 = vmatpush1.msra.mxu0 0.0
    %171 = vmatprep.subr.mxu0 0.0
    %172 = vmatpush1.msra.mxu0 0.0
    %173 = vmatprep.mubr.f32.mxu0 0.0
    %174 = vmatmul.mubr.f32.gmra.mrb[0].mxu0 %v85
    %v175 = vpop.f32.mrb[0].mxu0
    %v176 = vadd.f32 %v107, %v175
    %v177 = vpop.f32.mrb[0].mxu0
    %178 = vdwg.mxu0
    %v179 = vmax.f32 %v176, 0.0
    %v180 = vld [vmem:[#allocation8] sm:$0xff]
    %v181 = vld [vmem:[#allocation8 + $0x8] sm:$0xff]
    %v182 = vld [vmem:[#allocation8 + $0x10] sm:$0xff]
    %v183 = vld [vmem:[#allocation8 + $0x18] sm:$0xff]
    %v184 = vld [vmem:[#allocation8 + $0x20] sm:$0xff]
    %v185 = vld [vmem:[#allocation8 + $0x28] sm:$0xff]
    %v186 = vld [vmem:[#allocation8 + $0x30] sm:$0xff]
    %v187 = vld [vmem:[#allocation8 + $0x38] sm:$0xff]
    %v188 = vld [vmem:[#allocation8 + $0x40] sm:$0xff]
    %v189 = vld [vmem:[#allocation8 + $0x48] sm:$0xff]
    %v190 = vld [vmem:[#allocation8 + $0x50] sm:$0xff]
    %v191 = vld [vmem:[#allocation8 + $0x58] sm:$0xff]
    %v192 = vld [vmem:[#allocation8 + $0x60] sm:$0xff]
    %v193 = vld [vmem:[#allocation8 + $0x68] sm:$0xff]
    %v194 = vld [vmem:[#allocation8 + $0x70] sm:$0xff]
    %v195 = vld [vmem:[#allocation8 + $0x78] sm:$0xff]
    %v196 = vld [vmem:[%s5] sm:$0x1]
    %v198 = vlaneseq
    %v199 = vshrl.u32 %v198, 7
    %v200 = vsub.s32 0, %v199
    %v201 = vrot.slane %v196, %v200
    %203 = vmatprep.subr.mxu0 0.0
    %204 = vmatpush1.msra.mxu0 %v180
    %205 = vmatprep.subr.mxu0 0.0
    %206 = vmatpush1.msra.mxu0 %v181
    %207 = vmatprep.subr.mxu0 0.0
    %208 = vmatpush1.msra.mxu0 %v182
    %209 = vmatprep.subr.mxu0 0.0
    %210 = vmatpush1.msra.mxu0 %v183
    %211 = vmatprep.subr.mxu0 0.0
    %212 = vmatpush1.msra.mxu0 %v184
    %213 = vmatprep.subr.mxu0 0.0
    %214 = vmatpush1.msra.mxu0 %v185
    %215 = vmatprep.subr.mxu0 0.0
    %216 = vmatpush1.msra.mxu0 %v186
    %217 = vmatprep.subr.mxu0 0.0
    %218 = vmatpush1.msra.mxu0 %v187
    %219 = vmatprep.subr.mxu0 0.0
    %220 = vmatpush1.msra.mxu0 %v188
    %221 = vmatprep.subr.mxu0 0.0
    %222 = vmatpush1.msra.mxu0 %v189
    %223 = vmatprep.subr.mxu0 0.0
    %224 = vmatpush1.msra.mxu0 %v190
    %225 = vmatprep.subr.mxu0 0.0
    %226 = vmatpush1.msra.mxu0 %v191
    %227 = vmatprep.subr.mxu0 0.0
    %228 = vmatpush1.msra.mxu0 %v192
    %229 = vmatprep.subr.mxu0 0.0
    %230 = vmatpush1.msra.mxu0 %v193
    %231 = vmatprep.subr.mxu0 0.0
    %232 = vmatpush1.msra.mxu0 %v194
    %233 = vmatprep.subr.mxu0 0.0
    %234 = vmatpush1.msra.mxu0 %v195
    %235 = vmatprep.subr.mxu0 0.0
    %236 = vmatpush1.msra.mxu0 0.0
    %237 = vmatprep.subr.mxu0 0.0
    %238 = vmatpush1.msra.mxu0 0.0
    %239 = vmatprep.subr.mxu0 0.0
    %240 = vmatpush1.msra.mxu0 0.0
    %241 = vmatprep.subr.mxu0 0.0
    %242 = vmatpush1.msra.mxu0 0.0
    %243 = vmatprep.subr.mxu0 0.0
    %244 = vmatpush1.msra.mxu0 0.0
    %245 = vmatprep.subr.mxu0 0.0
    %246 = vmatpush1.msra.mxu0 0.0
    %247 = vmatprep.subr.mxu0 0.0
    %248 = vmatpush1.msra.mxu0 0.0
    %249 = vmatprep.subr.mxu0 0.0
    %250 = vmatpush1.msra.mxu0 0.0
    %251 = vmatprep.subr.mxu0 0.0
    %252 = vmatpush1.msra.mxu0 0.0
    %253 = vmatprep.subr.mxu0 0.0
    %254 = vmatpush1.msra.mxu0 0.0
    %255 = vmatprep.subr.mxu0 0.0
    %256 = vmatpush1.msra.mxu0 0.0
    %257 = vmatprep.subr.mxu0 0.0
    %258 = vmatpush1.msra.mxu0 0.0
    %259 = vmatprep.subr.mxu0 0.0
    %260 = vmatpush1.msra.mxu0 0.0
    %261 = vmatprep.subr.mxu0 0.0
    %262 = vmatpush1.msra.mxu0 0.0
    %263 = vmatprep.subr.mxu0 0.0
    %264 = vmatpush1.msra.mxu0 0.0
    %265 = vmatprep.subr.mxu0 0.0
    %266 = vmatpush1.msra.mxu0 0.0
    %267 = vmatprep.mubr.f32.mxu0 0.0
    %268 = vmatmul.mubr.f32.gmra.mrb[0].mxu0 %v179
    %v269 = vpop.f32.mrb[0].mxu0
    %v270 = vadd.f32 %v201, %v269
    %v271 = vpop.f32.mrb[0].mxu0
    %272 = vdwg.mxu0
    %v273 = vmax.f32 %v270, 0.0
    %v274 = vsub.f32 %v179, %v273
    %v275 = vstv %s84
    %v276 = vmul.f32 %v275, %v274
    %v277 = vadd.f32 %v273, %v276
    %v278 = vld [vmem:[#allocation9] sm:$0xff]
    %v279 = vld [vmem:[#allocation9 + $0x8] sm:$0xff]
    %v280 = vld [vmem:[#allocation9 + $0x10] sm:$0xff]
    %v281 = vld [vmem:[#allocation9 + $0x18] sm:$0xff]
    %v282 = vld [vmem:[#allocation9 + $0x20] sm:$0xff]
    %v283 = vld [vmem:[#allocation9 + $0x28] sm:$0xff]
    %v284 = vld [vmem:[#allocation9 + $0x30] sm:$0xff]
    %v285 = vld [vmem:[#allocation9 + $0x38] sm:$0xff]
    %v286 = vld [vmem:[#allocation9 + $0x40] sm:$0xff]
    %v287 = vld [vmem:[#allocation9 + $0x48] sm:$0xff]
    %v288 = vld [vmem:[#allocation9 + $0x50] sm:$0xff]
    %v289 = vld [vmem:[#allocation9 + $0x58] sm:$0xff]
    %v290 = vld [vmem:[#allocation9 + $0x60] sm:$0xff]
    %v291 = vld [vmem:[#allocation9 + $0x68] sm:$0xff]
    %v292 = vld [vmem:[#allocation9 + $0x70] sm:$0xff]
    %v293 = vld [vmem:[#allocation9 + $0x78] sm:$0xff]
    %v294 = vld [vmem:[%s7] sm:$0x1]
    %v296 = vlaneseq
    %v297 = vshrl.u32 %v296, 7
    %v298 = vsub.s32 0, %v297
    %v299 = vrot.slane %v294, %v298
    %301 = vmatprep.subr.mxu0 0.0
    %302 = vmatpush1.msra.mxu0 %v278
    %303 = vmatprep.subr.mxu0 0.0
    %304 = vmatpush1.msra.mxu0 %v279
    %305 = vmatprep.subr.mxu0 0.0
    %306 = vmatpush1.msra.mxu0 %v280
    %307 = vmatprep.subr.mxu0 0.0
    %308 = vmatpush1.msra.mxu0 %v281
    %309 = vmatprep.subr.mxu0 0.0
    %310 = vmatpush1.msra.mxu0 %v282
    %311 = vmatprep.subr.mxu0 0.0
    %312 = vmatpush1.msra.mxu0 %v283
    %313 = vmatprep.subr.mxu0 0.0
    %314 = vmatpush1.msra.mxu0 %v284
    %315 = vmatprep.subr.mxu0 0.0
    %316 = vmatpush1.msra.mxu0 %v285
    %317 = vmatprep.subr.mxu0 0.0
    %318 = vmatpush1.msra.mxu0 %v286
    %319 = vmatprep.subr.mxu0 0.0
    %320 = vmatpush1.msra.mxu0 %v287
    %321 = vmatprep.subr.mxu0 0.0
    %322 = vmatpush1.msra.mxu0 %v288
    %323 = vmatprep.subr.mxu0 0.0
    %324 = vmatpush1.msra.mxu0 %v289
    %325 = vmatprep.subr.mxu0 0.0
    %326 = vmatpush1.msra.mxu0 %v290
    %327 = vmatprep.subr.mxu0 0.0
    %328 = vmatpush1.msra.mxu0 %v291
    %329 = vmatprep.subr.mxu0 0.0
    %330 = vmatpush1.msra.mxu0 %v292
    %331 = vmatprep.subr.mxu0 0.0
    %332 = vmatpush1.msra.mxu0 %v293
    %333 = vmatprep.subr.mxu0 0.0
    %334 = vmatpush1.msra.mxu0 0.0
    %335 = vmatprep.subr.mxu0 0.0
    %336 = vmatpush1.msra.mxu0 0.0
    %337 = vmatprep.subr.mxu0 0.0
    %338 = vmatpush1.msra.mxu0 0.0
    %339 = vmatprep.subr.mxu0 0.0
    %340 = vmatpush1.msra.mxu0 0.0
    %341 = vmatprep.subr.mxu0 0.0
    %342 = vmatpush1.msra.mxu0 0.0
    %343 = vmatprep.subr.mxu0 0.0
    %344 = vmatpush1.msra.mxu0 0.0
    %345 = vmatprep.subr.mxu0 0.0
    %346 = vmatpush1.msra.mxu0 0.0
    %347 = vmatprep.subr.mxu0 0.0
    %348 = vmatpush1.msra.mxu0 0.0
    %349 = vmatprep.subr.mxu0 0.0
    %350 = vmatpush1.msra.mxu0 0.0
    %351 = vmatprep.subr.mxu0 0.0
    %352 = vmatpush1.msra.mxu0 0.0
    %353 = vmatprep.subr.mxu0 0.0
    %354 = vmatpush1.msra.mxu0 0.0
    %355 = vmatprep.subr.mxu0 0.0
    %356 = vmatpush1.msra.mxu0 0.0
    %357 = vmatprep.subr.mxu0 0.0
    %358 = vmatpush1.msra.mxu0 0.0
    %359 = vmatprep.subr.mxu0 0.0
    %360 = vmatpush1.msra.mxu0 0.0
    %361 = vmatprep.subr.mxu0 0.0
    %362 = vmatpush1.msra.mxu0 0.0
    %363 = vmatprep.subr.mxu0 0.0
    %364 = vmatpush1.msra.mxu0 0.0
    %365 = vmatprep.mubr.f32.mxu0 0.0
    %366 = vmatmul.mubr.f32.gmra.mrb[0].mxu0 %v277
    %v367 = vpop.f32.mrb[0].mxu0
    %v368 = vadd.f32 %v299, %v367
    %v369 = vpop.f32.mrb[0].mxu0
    %370 = vdwg.mxu0
    %371 = vst [vmem:[#allocation11] sm:$0xff] %v368
    // Predicated region
    $region50: #{tpu_custom_call.1} parent=1 // pred_check
      _
    $region51: #{tpu_custom_call.1} parent=1 // pred_check_branch
      %373 = sbr.rel (0) target = $region53
    $region52: #{tpu_custom_call.1} parent=1 // pred_region
      %s375 = ssub.s32 128, 128
      %376 = vsyncadd [#allocation5], %s375
      %s378 = sshll.u32 [#allocation11], 4
      %s379 = int_to_ptr.vmem [resolvable:$true] %s378
      %381 = dma.vmem_to_hbm [thread:$0]  %s379, 128, %s8, [#allocation5]
    $region53: #{tpu_custom_call.1} parent=1 // pred_fallthru
      _
    // Predicated region
    $region54: #{tpu_custom_call.1} parent=1 // pred_check
      _
    $region55: #{tpu_custom_call.1} parent=1 // pred_check_branch
      %383 = sbr.rel (0) target = $region57
    $region56: #{tpu_custom_call.1} parent=1 // pred_region
      %384 = dma.done [#allocation5], 128
    $region57: #{tpu_custom_call.1} parent=1 // pred_fallthru
      _
    %385 = vsyncpa [#allocation4], 1
    %386 = vsyncpa [#allocation7], 1
    %387 = vsyncpa [#allocation10], 1
    %388 = vsyncpa [#allocation5], 1

</llo_original>
